<compile_context>
chip_gen: v6e
topology: v6e:2x2x1
jax: 0.10.0
libtpu: 0.0.40
codegen_flags: <defaults>
</compile_context>

<pallas_src>
import functools

import jax
import jax.numpy as jnp
from jax.experimental import pallas as pl
from jax.experimental.pallas import tpu as pltpu


# ----------------------------------------------------------------------------
# Pallas kernel: one NGCF propagation layer, tiled (rows, K).
# ----------------------------------------------------------------------------
def _ngcf_layer_kernel(a_ref, ego_k_ref, ego_row_ref, w_ref, b_ref,
                       out_ref, acc_ref):
    k = pl.program_id(1)

    @pl.when(k == 0)
    def _():
        acc_ref[...] = jnp.zeros_like(acc_ref)

    # side partial: A_hat[rows, kcols] @ ego[kcols, :]
    # A is streamed bf16; cast the small ego block to bf16 so the MXU runs at
    # native bf16 rate; accumulate in f32.
    acc_ref[...] += jnp.dot(a_ref[...],
                            ego_k_ref[...].astype(jnp.bfloat16),
                            preferred_element_type=jnp.float32)

    @pl.when(k == pl.num_programs(1) - 1)
    def _():
        side = acc_ref[...]                         # (tm, D) f32
        ego_rows = ego_row_ref[...]                 # (tm, D) f32
        # Fused projection: [side, ego*side] @ [W_gc; W_bi] + (b_gc + b_bi)
        lhs = jnp.concatenate([side, ego_rows * side], axis=-1)   # (tm, 2D)
        pre = jnp.dot(lhs, w_ref[...],
                      preferred_element_type=jnp.float32) + b_ref[...]
        # LeakyReLU(negative_slope=0.2)
        ego_new = jnp.where(pre >= 0.0, pre, 0.2 * pre)
        # F.normalize(p=2, dim=1): x * rsqrt(max(sum(x*x), 1e-24))
        sumsq = jnp.sum(ego_new * ego_new, axis=1, keepdims=True)
        inv_norm = jax.lax.rsqrt(jnp.maximum(sumsq, 1e-24))
        norm = ego_new * inv_norm
        # Lane-dense output slab (tm, 2D): [new_ego | norm]
        out_ref[...] = jnp.concatenate([ego_new, norm], axis=-1)


def ngcf_layer(a_hat_bf16, ego, w_cat, b_cat, *, tm=256, tk=512):
    """One NGCF layer.

    a_hat_bf16: (N, N) bfloat16 normalized adjacency.
    ego:        (N, D) float32 node embeddings.
    w_cat:      (2D, D) float32 = vstack([W_gc, W_bi]).
    b_cat:      (1, D)  float32 = b_gc + b_bi.
    Returns (new_ego, norm_emb), both (N, D) float32.
    """
    n, d = ego.shape
    tm = min(tm, n)
    tk = min(tk, n)
    assert n % tm == 0 and n % tk == 0, "pad N to a multiple of the tiles"
    assert tm % 8 == 0 or tm == n
    assert tk % 128 == 0 or tk == n

    out = pl.pallas_call(
        _ngcf_layer_kernel,
        out_shape=jax.ShapeDtypeStruct((n, 2 * d), jnp.float32),
        grid_spec=pltpu.PrefetchScalarGridSpec(
            num_scalar_prefetch=0,
            grid=(n // tm, n // tk),                       # (rows, K) — K last
            in_specs=[
                pl.BlockSpec((tm, tk), lambda i, k: (i, k)),     # A_hat tile (bf16)
                pl.BlockSpec((tk, d), lambda i, k: (k, 0)),      # ego K-stream
                pl.BlockSpec((tm, d), lambda i, k: (i, 0)),      # ego row block (bi term)
                pl.BlockSpec((2 * d, d), lambda i, k: (0, 0)),   # fused W (grid-invariant)
                pl.BlockSpec((1, d), lambda i, k: (0, 0)),       # fused bias
            ],
            out_specs=pl.BlockSpec((tm, 2 * d), lambda i, k: (i, 0)),
            scratch_shapes=[pltpu.VMEM((tm, d), jnp.float32)],   # side accumulator
        ),
        compiler_params=pltpu.CompilerParams(
            dimension_semantics=("parallel", "arbitrary"),
            vmem_limit_bytes=48 * 1024 * 1024),
    )(a_hat_bf16, ego, ego, w_cat, b_cat)

    return out[:, :d], out[:, d:]


# ----------------------------------------------------------------------------
# Full NGCF forward (glue in plain JAX, per-layer compute in Pallas).
# ----------------------------------------------------------------------------
def ngcf_forward(params, a_hat, user, item_i, item_j, n_user,
                 num_layers=3, tm=256, tk=512):
    # Stream the dominant N^2 traffic (A_hat) at half width.
    a_bf16 = a_hat.astype(jnp.bfloat16)
    ego = jnp.concatenate([params["user_emb"], params["item_emb"]], axis=0)
    all_embeddings = [ego]
    for k in range(num_layers):
        w_cat = jnp.concatenate(
            [params[f"W_gc_{k}"], params[f"W_bi_{k}"]], axis=0)    # (2D, D)
        b_cat = params[f"b_gc_{k}"] + params[f"b_bi_{k}"]          # (1, D)
        ego, norm_emb = ngcf_layer(a_bf16, ego, w_cat, b_cat, tm=tm, tk=tk)
        all_embeddings.append(norm_emb)
    all_embeddings = jnp.concatenate(all_embeddings, axis=1)  # (N, (L+1)*D)

    u_g = all_embeddings[:n_user, :]
    i_g = all_embeddings[n_user:, :]
    return u_g[user, :], i_g[item_i, :], i_g[item_j, :]


# ----------------------------------------------------------------------------
# Pure-JAX reference (mirrors the kernel's bf16 streaming) for a sanity check.
# ----------------------------------------------------------------------------
def ngcf_reference(params, a_hat, user, item_i, item_j, n_user, num_layers=3):
    hp = jax.lax.Precision.HIGHEST
    a = a_hat.astype(jnp.bfloat16).astype(jnp.float32)
    ego = jnp.concatenate([params["user_emb"], params["item_emb"]], axis=0)
    allv = [ego]
    for k in range(num_layers):
        side = jnp.dot(a, ego.astype(jnp.bfloat16).astype(jnp.float32),
                       precision=hp)
        s = jnp.dot(side, params[f"W_gc_{k}"], precision=hp) + params[f"b_gc_{k}"]
        bi = jnp.dot(ego * side, params[f"W_bi_{k}"], precision=hp) + params[f"b_bi_{k}"]
        pre = s + bi
        ego = jnp.where(pre >= 0.0, pre, 0.2 * pre)
        nrm = jnp.sqrt(jnp.sum(ego * ego, axis=1, keepdims=True))
        allv.append(ego / jnp.maximum(nrm, 1e-12))
    allv = jnp.concatenate(allv, axis=1)
    u_g = allv[:n_user, :]
    i_g = allv[n_user:, :]
    return u_g[user, :], i_g[item_i, :], i_g[item_j, :]


# ----------------------------------------------------------------------------
# Deterministic parameter / adjacency construction (xavier_uniform analogue).
# ----------------------------------------------------------------------------
def xavier_uniform(key, shape):
    fan_in, fan_out = shape[0], shape[1]
    limit = (6.0 / (fan_in + fan_out)) ** 0.5
    return jax.random.uniform(key, shape, jnp.float32, -limit, limit)


def build_params(key, n_user, n_item, factors, num_layers=3):
    keys = jax.random.split(key, 2 + 4 * num_layers)
    params = {
        "user_emb": xavier_uniform(keys[0], (n_user, factors)),
        "item_emb": xavier_uniform(keys[1], (n_item, factors)),
    }
    idx = 2
    for k in range(num_layers):
        params[f"W_gc_{k}"] = xavier_uniform(keys[idx], (factors, factors)); idx += 1
        params[f"b_gc_{k}"] = xavier_uniform(keys[idx], (1, factors)); idx += 1
        params[f"W_bi_{k}"] = xavier_uniform(keys[idx], (factors, factors)); idx += 1
        params[f"b_bi_{k}"] = xavier_uniform(keys[idx], (1, factors)); idx += 1
    return params


def build_norm_adj(key, n_user, n_item):
    """Symmetric-normalized bipartite adjacency, dense (N, N) float32."""
    n = n_user + n_item
    r = (jax.random.uniform(key, (n_user, n_item)) < 0.2).astype(jnp.float32)
    a = jnp.zeros((n, n), jnp.float32)
    a = a.at[:n_user, n_user:].set(r)
    a = a.at[n_user:, :n_user].set(r.T)
    deg = jnp.sum(a, axis=1)
    d_inv_sqrt = jnp.where(deg > 0, 1.0 / jnp.sqrt(jnp.maximum(deg, 1e-12)), 0.0)
    return a * d_inv_sqrt[:, None] * d_inv_sqrt[None, :]


# ----------------------------------------------------------------------------
if __name__ == "__main__":
    # N = 256 so the kernel exercises both the row ("parallel") and K
    # ("arbitrary") grid axes with tm = tk = 128.
    n_user, n_item, factors = 96, 160, 16
    key = jax.random.PRNGKey(0)
    k_params, k_adj, k_u, k_i, k_j = jax.random.split(key, 5)

    params = build_params(k_params, n_user, n_item, factors)
    a_hat = build_norm_adj(k_adj, n_user, n_item)

    batch = 8
    user = jax.random.randint(k_u, (batch,), 0, n_user)
    item_i = jax.random.randint(k_i, (batch,), 0, n_item)
    item_j = jax.random.randint(k_j, (batch,), 0, n_item)

    fwd = jax.jit(functools.partial(ngcf_forward, n_user=n_user, tm=128, tk=128))
    u_emb, pos_emb, neg_emb = fwd(params, a_hat, user, item_i, item_j)
    jax.block_until_ready((u_emb, pos_emb, neg_emb))

    assert u_emb.shape == (batch, 4 * factors)
    assert pos_emb.shape == (batch, 4 * factors)
    assert neg_emb.shape == (batch, 4 * factors)

    # Numerical sanity check against the pure-JAX reference.
    u_ref, p_ref, n_ref = ngcf_reference(params, a_hat, user, item_i, item_j, n_user)
    max_diff = max(
        float(jnp.max(jnp.abs(u_emb - u_ref))),
        float(jnp.max(jnp.abs(pos_emb - p_ref))),
        float(jnp.max(jnp.abs(neg_emb - n_ref))),
    )
    assert max_diff < 5e-2, f"kernel/reference mismatch: {max_diff}"

    print("KERNEL_OK")
</pallas_src>

<mosaic_0001>
module attributes {stable_mosaic.version = 11 : i64} {
  func.func @_ngcf_layer_kernel(%arg0: i32, %arg1: i32, %arg2: memref<128x128xbf16, #tpu.memory_space<vmem>>, %arg3: memref<128x16xf32, #tpu.memory_space<vmem>>, %arg4: memref<128x16xf32, #tpu.memory_space<vmem>>, %arg5: memref<32x16xf32, #tpu.memory_space<vmem>>, %arg6: memref<1x16xf32, #tpu.memory_space<vmem>>, %arg7: memref<128x32xf32, #tpu.memory_space<vmem>>, %arg8: memref<128x16xf32, #tpu.memory_space<vmem>>) attributes {dimension_semantics = [#tpu.dimension_semantics<parallel>, #tpu.dimension_semantics<arbitrary>], iteration_bounds = array<i64: 2, 2>, scalar_prefetch = 0 : i64, scratch_operands = 1 : i64, tpu.core_type = #tpu.core_type<tc>, window_params = [{transform_indices = @transform_0, window_bounds = array<i64: 128, 128>}, {transform_indices = @transform_1, window_bounds = array<i64: 128, 16>}, {transform_indices = @transform_2, window_bounds = array<i64: 128, 16>}, {pipeline_mode = #tpu.pipeline_mode<synchronous>, transform_indices = @transform_3, window_bounds = array<i64: 32, 16>}, {pipeline_mode = #tpu.pipeline_mode<synchronous>, transform_indices = @transform_4, window_bounds = array<i64: 1, 16>}, {transform_indices = @transform_5, window_bounds = array<i64: 128, 32>}]} {
    %c0_i32 = arith.constant 0 : i32
    %0 = arith.cmpi eq, %arg1, %c0_i32 : i32
    %1 = arith.extui %0 : i1 to i32
    %c0_i32_0 = arith.constant 0 : i32
    %2 = arith.cmpi ne, %1, %c0_i32_0 : i32
    scf.if %2 {
      %cst_9 = arith.constant 0.000000e+00 : f32
      %13 = vector.broadcast %cst_9 : f32 to vector<128x16xf32>
      %c0_10 = arith.constant 0 : index
      %c0_11 = arith.constant 0 : index
      %14 = vector.load %arg8[%c0_10, %c0_11] : memref<128x16xf32, #tpu.memory_space<vmem>>, vector<128x16xf32>
      tpu.vector_store %arg8[%c0_10, %c0_11], %13 {strides = array<i32>} : memref<128x16xf32, #tpu.memory_space<vmem>>, vector<128x16xf32>,
    } else {
    }
    %c0 = arith.constant 0 : index
    %c0_1 = arith.constant 0 : index
    %3 = vector.load %arg8[%c0, %c0_1] : memref<128x16xf32, #tpu.memory_space<vmem>>, vector<128x16xf32>
    %c0_2 = arith.constant 0 : index
    %c0_3 = arith.constant 0 : index
    %4 = vector.load %arg2[%c0_2, %c0_3] : memref<128x128xbf16, #tpu.memory_space<vmem>>, vector<128x128xbf16>
    %c0_4 = arith.constant 0 : index
    %c0_5 = arith.constant 0 : index
    %5 = vector.load %arg3[%c0_4, %c0_5] : memref<128x16xf32, #tpu.memory_space<vmem>>, vector<128x16xf32>
    %6 = arith.truncf %5 : vector<128x16xf32> to vector<128x16xbf16>
    %cst = arith.constant dense<0.000000e+00> : vector<128x16xf32>
    %7 = tpu.matmul %4, %6, %cst {dimension_numbers = #tpu.dot_dimension_numbers<[1], [0], [0], [1], [0, 0, 1, 1], [], []>} : vector<128x128xbf16>, vector<128x16xbf16>, vector<128x16xf32> -> vector<128x16xf32>
    %8 = arith.addf %3, %7 : vector<128x16xf32>
    %c0_6 = arith.constant 0 : index
    %c0_7 = arith.constant 0 : index
    %9 = vector.load %arg8[%c0_6, %c0_7] : memref<128x16xf32, #tpu.memory_space<vmem>>, vector<128x16xf32>
    tpu.vector_store %arg8[%c0_6, %c0_7], %8 {strides = array<i32>} : memref<128x16xf32, #tpu.memory_space<vmem>>, vector<128x16xf32>,
    %c1_i32 = arith.constant 1 : i32
    %10 = arith.cmpi eq, %arg1, %c1_i32 : i32
    %11 = arith.extui %10 : i1 to i32
    %c0_i32_8 = arith.constant 0 : i32
    %12 = arith.cmpi ne, %11, %c0_i32_8 : i32
    scf.if %12 {
      %c0_9 = arith.constant 0 : index
      %c0_10 = arith.constant 0 : index
      %13 = vector.load %arg8[%c0_9, %c0_10] : memref<128x16xf32, #tpu.memory_space<vmem>>, vector<128x16xf32>
      %c0_11 = arith.constant 0 : index
      %c0_12 = arith.constant 0 : index
      %14 = vector.load %arg4[%c0_11, %c0_12] : memref<128x16xf32, #tpu.memory_space<vmem>>, vector<128x16xf32>
      %15 = arith.mulf %14, %13 : vector<128x16xf32>
      %16 = tpu.concatenate %13, %15 in 1 : vector<128x16xf32>, vector<128x16xf32> -> vector<128x32xf32>
      %c0_13 = arith.constant 0 : index
      %c0_14 = arith.constant 0 : index
      %17 = vector.load %arg5[%c0_13, %c0_14] : memref<32x16xf32, #tpu.memory_space<vmem>>, vector<32x16xf32>
      %cst_15 = arith.constant dense<0.000000e+00> : vector<128x16xf32>
      %18 = tpu.matmul %16, %17, %cst_15 {dimension_numbers = #tpu.dot_dimension_numbers<[1], [0], [0], [1], [0, 0, 1, 1], [], []>} : vector<128x32xf32>, vector<32x16xf32>, vector<128x16xf32> -> vector<128x16xf32>
      %c0_16 = arith.constant 0 : index
      %c0_17 = arith.constant 0 : index
      %19 = vector.load %arg6[%c0_16, %c0_17] : memref<1x16xf32, #tpu.memory_space<vmem>>, vector<1x16xf32>
      %20 = vector.broadcast %19 : vector<1x16xf32> to vector<128x16xf32>
      %21 = arith.addf %18, %20 : vector<128x16xf32>
      %cst_18 = arith.constant 0.000000e+00 : f32
      %22 = vector.broadcast %cst_18 : f32 to vector<128x16xf32>
      %23 = arith.cmpf oge, %21, %22 : vector<128x16xf32>
      %cst_19 = arith.constant 2.000000e-01 : f32
      %24 = vector.broadcast %cst_19 : f32 to vector<128x16xf32>
      %25 = arith.mulf %24, %21 : vector<128x16xf32>
      %26 = arith.select %23, %21, %25 : vector<128x16xi1>, vector<128x16xf32>
      %27 = arith.mulf %26, %26 : vector<128x16xf32>
      %cst_20 = arith.constant dense<0.000000e+00> : vector<128xf32>
      %28 = vector.multi_reduction <add>, %27, %cst_20 [1] : vector<128x16xf32> to vector<128xf32>
      %29 = vector.shape_cast %28 : vector<128xf32> to vector<128x1xf32>
      %cst_21 = arith.constant 1.000000e-24 : f32
      %30 = vector.broadcast %cst_21 : f32 to vector<128x1xf32>
      %31 = arith.maximumf %29, %30 : vector<128x1xf32>
      %32 = math.rsqrt %31 : vector<128x1xf32>
      %33 = vector.broadcast %32 : vector<128x1xf32> to vector<128x16xf32>
      %34 = arith.mulf %26, %33 : vector<128x16xf32>
      %35 = tpu.concatenate %26, %34 in 1 : vector<128x16xf32>, vector<128x16xf32> -> vector<128x32xf32>
      %c0_22 = arith.constant 0 : index
      %c0_23 = arith.constant 0 : index
      %36 = vector.load %arg7[%c0_22, %c0_23] : memref<128x32xf32, #tpu.memory_space<vmem>>, vector<128x32xf32>
      tpu.vector_store %arg7[%c0_22, %c0_23], %35 {strides = array<i32>} : memref<128x32xf32, #tpu.memory_space<vmem>>, vector<128x32xf32>,
    } else {
    }
    return
  }
  func.func @transform_0(%arg0: i32, %arg1: i32) -> (i32, i32) {
    %c0_i32 = arith.constant 0 : i32
    return %arg0, %arg1 : i32, i32
  }
  func.func @transform_1(%arg0: i32, %arg1: i32) -> (i32, i32) {
    %c0_i32 = arith.constant 0 : i32
    %c0_i32_0 = arith.constant 0 : i32
    return %arg1, %c0_i32 : i32, i32
  }
  func.func @transform_2(%arg0: i32, %arg1: i32) -> (i32, i32) {
    %c0_i32 = arith.constant 0 : i32
    %c0_i32_0 = arith.constant 0 : i32
    return %arg0, %c0_i32 : i32, i32
  }
  func.func @transform_3(%arg0: i32, %arg1: i32) -> (i32, i32) {
    %c0_i32 = arith.constant 0 : i32
    %c0_i32_0 = arith.constant 0 : i32
    %c0_i32_1 = arith.constant 0 : i32
    return %c0_i32, %c0_i32_0 : i32, i32
  }
  func.func @transform_4(%arg0: i32, %arg1: i32) -> (i32, i32) {
    %c0_i32 = arith.constant 0 : i32
    %c0_i32_0 = arith.constant 0 : i32
    %c0_i32_1 = arith.constant 0 : i32
    return %c0_i32, %c0_i32_0 : i32, i32
  }
  func.func @transform_5(%arg0: i32, %arg1: i32) -> (i32, i32) {
    %c0_i32 = arith.constant 0 : i32
    %c0_i32_0 = arith.constant 0 : i32
    return %arg0, %c0_i32 : i32, i32
  }
}

</mosaic_0001>

<llo_original>
// kernel: ngcf_forward.3
$region0: #{ngcf_forward.3}
  #allocation0 [shape = 'u32[]', space=smem, size = 0x4, offset = 0x4, fixed_abs, tag = 'smem constant byte address 0x4 - core index']
  #allocation1 [shape = 'u32[144,128]{1,0:T(1,128)}', space=vmem, size = 0x12000, scoped, tag = 'internal scratch']
  #allocation2 [shape = 'f32[128,16]{1,0:T(8,128)}', space=vmem, size = 0x10000, scoped, tag = 'scratch operand']
  %s0 = inlined_call_operand.vmem [shape: bf16[256,256], index: 0, kind: input, shape index: {}]
  %s1 = inlined_call_operand.vmem [shape: f32[256,16], index: 1, kind: input, shape index: {}, may-alias: {1,2}]
  %s2 = inlined_call_operand.vmem [shape: f32[256,16], index: 2, kind: input, shape index: {}, may-alias: {1,2}]
  %s3 = inlined_call_operand.vmem [shape: f32[32,16], index: 3, kind: input, shape index: {}]
  %s4 = inlined_call_operand.vmem [shape: f32[1,16], index: 4, kind: input, shape index: {}]
  %s5 = inlined_call_operand.vmem [shape: f32[256,32], index: 5, kind: output, shape index: {}]
  %s6 = sld [smem:[#allocation0]]
  $region102: #{ngcf_forward.3} parent=0
    _
  %s8 = ssub.s32 1, %s6
  %s9 = scalar_select 0, %s8, %s6
  $region1: #{ngcf_forward.3} parent=0
    #allocation3 [shape = 'u8[65536]{0}', space=vmem, size = 0x10000, scoped, tag = 'input window, operand 0']
    loop: start=0, step=1, limit=6
    $region2: #{ngcf_forward.3} parent=1 // loop_pre_header
      _
    $region3: #{ngcf_forward.3} parent=1 // loop_header
      %s11 = sphi 0, %s15
      %p12 = scmp.ge.s32.totalorder %s11, 6
      %s18 = sphi 0, %s30
      %s19 = sphi 0, %s26
      %s20 = sphi 0, %s18
      %s21 = sphi 0, %s19
      %s22 = sphi 0, %s20
      %s23 = sphi 0, %s21
      %s35 = sphi 0, %s37
      %s38 = sphi 0, %s35
      %s39 = sphi 0, %s38
      %s55 = sphi 0, %s39
      %s61 = sphi 0, %s63
      %s64 = sphi 0, %s61
      %s65 = sphi 0, %s64
      %s81 = sphi 0, %s65
      %s87 = sphi 0, %s89
      %s90 = sphi 0, %s87
      %s91 = sphi 0, %s90
      %s107 = sphi 0, %s91
      %s111 = sphi 0, %s111
      %s113 = sphi 0, %s111
      %s114 = sphi 0, %s113
      %s128 = sphi 0, %s114
      %s132 = sphi 0, %s132
      %s134 = sphi 0, %s132
      %s135 = sphi 0, %s134
      %s149 = sphi 0, %s135
      %s155 = sphi 0, %s157
      %s158 = sphi 0, %s155
      %s159 = sphi 0, %s158
      %s175 = sphi 0, %s159
    $region4: #{ngcf_forward.3} parent=1 // loop_header_branch
      %14 = sbr.rel (%p12) target = $region8
    $region5: #{ngcf_forward.3} parent=1 // loop_body
      %s16 = ssub.s32 %s11, 1
      %s17 = ssub.s32 %s11, 2
      %s24 = sadd.s32 1, %s19
      %p25 = scmp.ge.s32.totalorder %s24, 2
      %s26 = scalar_select %p25, 0, %s24
      %s27 = sadd.s32 1, %s18
      %s28 = scalar_select %p25, %s27, %s18
      %p29 = scmp.ge.s32.totalorder %s28, 2
      %s30 = scalar_select %p29, 0, %s28
      %s31 = ssub.s32 %s18, %s30
      %s32 = ssub.s32 %s19, %s26
      %s33 = sor.u32 %s31, %s32
      %p34 = scmp.eq.s32.totalorder %s33, 0
      %s36 = sadd.s32 %s35, 1
      %s37 = scalar_select %p34, %s35, %s36
      %p40 = pneg %p34
      %p41 = scmp.eq.s32.totalorder %s11, 3
      %p42 = por %p40, %p41
      %p43 = scmp.ne.s32.totalorder %s35, %s38
      %p44 = scmp.eq.s32.totalorder %s11, 0
      %p45 = por %p43, %p44
      %p46 = scmp.ne.s32.totalorder %s35, %s38
      %p47 = scmp.eq.s32.totalorder %s16, 3
      %p48 = por %p46, %p47
      %p49 = scmp.ne.s32.totalorder %s38, %s39
      %p50 = scmp.eq.s32.totalorder %s16, 0
      %p51 = por %p49, %p50
      %p52 = scmp.ne.s32.totalorder %s38, %s39
      %p53 = scmp.eq.s32.totalorder %s17, 3
      %p54 = por %p52, %p53
      %p56 = scmp.ne.s32.totalorder %s39, %s55
      %p57 = scmp.eq.s32.totalorder %s17, 0
      %p58 = por %p56, %p57
      %s59 = ssub.s32 %s19, %s26
      %p60 = scmp.eq.s32.totalorder %s59, 0
      %s62 = sadd.s32 %s61, 1
      %s63 = scalar_select %p60, %s61, %s62
      %p66 = pneg %p60
      %p67 = scmp.eq.s32.totalorder %s11, 3
      %p68 = por %p66, %p67
      %p69 = scmp.ne.s32.totalorder %s61, %s64
      %p70 = scmp.eq.s32.totalorder %s11, 0
      %p71 = por %p69, %p70
      %p72 = scmp.ne.s32.totalorder %s61, %s64
      %p73 = scmp.eq.s32.totalorder %s16, 3
      %p74 = por %p72, %p73
      %p75 = scmp.ne.s32.totalorder %s64, %s65
      %p76 = scmp.eq.s32.totalorder %s16, 0
      %p77 = por %p75, %p76
      %p78 = scmp.ne.s32.totalorder %s64, %s65
      %p79 = scmp.eq.s32.totalorder %s17, 3
      %p80 = por %p78, %p79
      %p82 = scmp.ne.s32.totalorder %s65, %s81
      %p83 = scmp.eq.s32.totalorder %s17, 0
      %p84 = por %p82, %p83
      %s85 = ssub.s32 %s18, %s30
      %p86 = scmp.eq.s32.totalorder %s85, 0
      %s88 = sadd.s32 %s87, 1
      %s89 = scalar_select %p86, %s87, %s88
      %p92 = pneg %p86
      %p93 = scmp.eq.s32.totalorder %s11, 3
      %p94 = por %p92, %p93
      %p95 = scmp.ne.s32.totalorder %s87, %s90
      %p96 = scmp.eq.s32.totalorder %s11, 0
      %p97 = por %p95, %p96
      %p98 = scmp.ne.s32.totalorder %s87, %s90
      %p99 = scmp.eq.s32.totalorder %s16, 3
      %p100 = por %p98, %p99
      %p101 = scmp.ne.s32.totalorder %s90, %s91
      %p102 = scmp.eq.s32.totalorder %s16, 0
      %p103 = por %p101, %p102
      %p104 = scmp.ne.s32.totalorder %s90, %s91
      %p105 = scmp.eq.s32.totalorder %s17, 3
      %p106 = por %p104, %p105
      %p108 = scmp.ne.s32.totalorder %s91, %s107
      %p109 = scmp.eq.s32.totalorder %s17, 0
      %p110 = por %p108, %p109
      %s112 = sadd.s32 %s111, 1
      %p115 = scmp.eq.s32.totalorder %s11, 3
      %p116 = scmp.ne.s32.totalorder %s111, %s113
      %p117 = scmp.eq.s32.totalorder %s11, 0
      %p118 = por %p116, %p117
      %p119 = scmp.ne.s32.totalorder %s111, %s113
      %p120 = scmp.eq.s32.totalorder %s16, 3
      %p121 = por %p119, %p120
      %p122 = scmp.ne.s32.totalorder %s113, %s114
      %p123 = scmp.eq.s32.totalorder %s16, 0
      %p124 = por %p122, %p123
      %p125 = scmp.ne.s32.totalorder %s113, %s114
      %p126 = scmp.eq.s32.totalorder %s17, 3
      %p127 = por %p125, %p126
      %p129 = scmp.ne.s32.totalorder %s114, %s128
      %p130 = scmp.eq.s32.totalorder %s17, 0
      %p131 = por %p129, %p130
      %s133 = sadd.s32 %s132, 1
      %p136 = scmp.eq.s32.totalorder %s11, 3
      %p137 = scmp.ne.s32.totalorder %s132, %s134
      %p138 = scmp.eq.s32.totalorder %s11, 0
      %p139 = por %p137, %p138
      %p140 = scmp.ne.s32.totalorder %s132, %s134
      %p141 = scmp.eq.s32.totalorder %s16, 3
      %p142 = por %p140, %p141
      %p143 = scmp.ne.s32.totalorder %s134, %s135
      %p144 = scmp.eq.s32.totalorder %s16, 0
      %p145 = por %p143, %p144
      %p146 = scmp.ne.s32.totalorder %s134, %s135
      %p147 = scmp.eq.s32.totalorder %s17, 3
      %p148 = por %p146, %p147
      %p150 = scmp.ne.s32.totalorder %s135, %s149
      %p151 = scmp.eq.s32.totalorder %s17, 0
      %p152 = por %p150, %p151
      %s153 = ssub.s32 %s18, %s30
      %p154 = scmp.eq.s32.totalorder %s153, 0
      %s156 = sadd.s32 %s155, 1
      %s157 = scalar_select %p154, %s155, %s156
      %p160 = pneg %p154
      %p161 = scmp.eq.s32.totalorder %s11, 3
      %p162 = por %p160, %p161
      %p163 = scmp.ne.s32.totalorder %s155, %s158
      %p164 = scmp.eq.s32.totalorder %s11, 0
      %p165 = por %p163, %p164
      %p166 = scmp.ne.s32.totalorder %s155, %s158
      %p167 = scmp.eq.s32.totalorder %s16, 3
      %p168 = por %p166, %p167
      %p169 = scmp.ne.s32.totalorder %s158, %s159
      %p170 = scmp.eq.s32.totalorder %s16, 0
      %p171 = por %p169, %p170
      %p172 = scmp.ne.s32.totalorder %s158, %s159
      %p173 = scmp.eq.s32.totalorder %s17, 3
      %p174 = por %p172, %p173
      %p176 = scmp.ne.s32.totalorder %s159, %s175
      %p177 = scmp.eq.s32.totalorder %s17, 0
      %p178 = por %p176, %p177
      %p179 = scmp.le.s32.totalorder 1, %s11
      %p180 = scmp.lt.s32.totalorder %s11, 5
      %p181 = pnand %p179, %p180
      %p182 = pneg %p181
      // Predicated region
      $region9: #{ngcf_forward.3} parent=5 // pred_check
        _
      $region10: #{ngcf_forward.3} parent=5 // pred_check_branch
        %184 = sbr.rel (%p181) target = $region12
      $region11: #{ngcf_forward.3} parent=5 // pred_region
        %s185 = ssub.s32 %s11, 1
        // Predicated region
        $region13: #{ngcf_forward.3} parent=11 // pred_check
          %p186 = pneg %p124
        $region14: #{ngcf_forward.3} parent=11 // pred_check_branch
          %188 = sbr.rel (%p186) target = $region16
        $region15: #{ngcf_forward.3} parent=11 // pred_region
          _
        $region16: #{ngcf_forward.3} parent=11 // pred_fallthru
          _
        // Predicated region
        $region17: #{ngcf_forward.3} parent=11 // pred_check
          %p189 = pneg %p145
        $region18: #{ngcf_forward.3} parent=11 // pred_check_branch
          %191 = sbr.rel (%p189) target = $region20
        $region19: #{ngcf_forward.3} parent=11 // pred_region
          _
        $region20: #{ngcf_forward.3} parent=11 // pred_fallthru
          _
      $region12: #{ngcf_forward.3} parent=5 // pred_fallthru
        _
      %p192 = scmp.lt.s32.totalorder %s11, 4
      // Predicated region
      $region21: #{ngcf_forward.3} parent=5 // pred_check
        %p193 = pneg %p192
      $region22: #{ngcf_forward.3} parent=5 // pred_check_branch
        %195 = sbr.rel (%p193) target = $region24
      $region23: #{ngcf_forward.3} parent=5 // pred_region
        // Predicated region
        $region25: #{ngcf_forward.3} parent=23 // pred_check
          %p196 = pneg %p45
        $region26: #{ngcf_forward.3} parent=23 // pred_check_branch
          %198 = sbr.rel (%p196) target = $region28
        $region27: #{ngcf_forward.3} parent=23 // pred_region
          %s199 = sand.u32 %s35, 1
          %s200 = sand.u32 %s35, 1
          %s201 = smul.addr %s200, 64
          %s202 = scalar_lea.vmem [#allocation3], %s201
          %s203 = smul.u32 16, %s18
          %s204 = smul.addr %s203, 2
          %s205 = sadd.s32 %s19, %s204
          %s206 = smul.addr %s205, 4
          %s207 = scalar_lea.vmem %s0, %s206
          // Predicated region
          $region29: #{ngcf_forward.3} parent=27 // pred_check
            _
          $region30: #{ngcf_forward.3} parent=27 // pred_check_branch
            %209 = sbr.rel (0) target = $region32
          $region31: #{ngcf_forward.3} parent=27 // pred_region
            // Predicated region
            $region33: #{ngcf_forward.3} parent=31 // pred_check
              _
            $region34: #{ngcf_forward.3} parent=31 // pred_check_branch
              %211 = sbr.rel target = $region36
            $region35: #{ngcf_forward.3} parent=31 // pred_region
              // Predicated region
              $region48: #{ngcf_forward.3} parent=35 // pred_check
                _
              $region49: #{ngcf_forward.3} parent=35 // pred_check_branch
                %257 = sbr.rel (0) target = $region51
              $region50: #{ngcf_forward.3} parent=35 // pred_region
                loop: start=0, step=1, limit=1
                $region52: #{ngcf_forward.3} parent=50 // loop_pre_header
                  _
                $region53: #{ngcf_forward.3} parent=50 // loop_header
                  %s259 = sphi 0, %s263
                  %p260 = scmp.ge.s32.totalorder %s259, 1
                  %s264 = sphi %s207, %s207
                  %s265 = sphi %s202, %s202
                $region54: #{ngcf_forward.3} parent=50 // loop_header_branch
                  %262 = sbr.rel (%p260) target = $region58
                $region55: #{ngcf_forward.3} parent=50 // loop_body
                  _
                $region56: #{ngcf_forward.3} parent=50 // loop_footer
                  %s263 = sadd.s32 1, %s259
                $region57: #{ngcf_forward.3} parent=50 // loop_footer_branch
                  %258 = sbr.rel target = $region53
                $region58: #{ngcf_forward.3} parent=50 // loop_exit
                  _
                %s267 = ssub.s32 16, 1
                loop: start=0, step=1, limit=1
                $region59: #{ngcf_forward.3} parent=50 // loop_pre_header
                  _
                $region60: #{ngcf_forward.3} parent=50 // loop_header
                  %s269 = sphi 0, %s273
                  %p270 = scmp.ge.s32.totalorder %s269, 1
                  %s274 = sphi %s207, %s207
                  %s275 = sphi %s202, %s202
                $region61: #{ngcf_forward.3} parent=50 // loop_header_branch
                  %272 = sbr.rel (%p270) target = $region65
                $region62: #{ngcf_forward.3} parent=50 // loop_body
                  %v276 = vld [vmem:[%s274] sm:%s267]
                  %277 = vst [vmem:[%s275] sm:%s267] %v276
                  %v278 = vld [vmem:[%s274 + $0x8] sm:%s267]
                  %279 = vst [vmem:[%s275 + $0x4] sm:%s267] %v278
                  %v280 = vld [vmem:[%s274 + $0x10] sm:%s267]
                  %281 = vst [vmem:[%s275 + $0x8] sm:%s267] %v280
                  %v282 = vld [vmem:[%s274 + $0x18] sm:%s267]
                  %283 = vst [vmem:[%s275 + $0xc] sm:%s267] %v282
                  %v284 = vld [vmem:[%s274 + $0x20] sm:%s267]
                  %285 = vst [vmem:[%s275 + $0x10] sm:%s267] %v284
                  %v286 = vld [vmem:[%s274 + $0x28] sm:%s267]
                  %287 = vst [vmem:[%s275 + $0x14] sm:%s267] %v286
                  %v288 = vld [vmem:[%s274 + $0x30] sm:%s267]
                  %289 = vst [vmem:[%s275 + $0x18] sm:%s267] %v288
                  %v290 = vld [vmem:[%s274 + $0x38] sm:%s267]
                  %291 = vst [vmem:[%s275 + $0x1c] sm:%s267] %v290
                  %v292 = vld [vmem:[%s274 + $0x40] sm:%s267]
                  %293 = vst [vmem:[%s275 + $0x20] sm:%s267] %v292
                  %v294 = vld [vmem:[%s274 + $0x48] sm:%s267]
                  %295 = vst [vmem:[%s275 + $0x24] sm:%s267] %v294
                  %v296 = vld [vmem:[%s274 + $0x50] sm:%s267]
                  %297 = vst [vmem:[%s275 + $0x28] sm:%s267] %v296
                  %v298 = vld [vmem:[%s274 + $0x58] sm:%s267]
                  %299 = vst [vmem:[%s275 + $0x2c] sm:%s267] %v298
                  %v300 = vld [vmem:[%s274 + $0x60] sm:%s267]
                  %301 = vst [vmem:[%s275 + $0x30] sm:%s267] %v300
                  %v302 = vld [vmem:[%s274 + $0x68] sm:%s267]
                  %303 = vst [vmem:[%s275 + $0x34] sm:%s267] %v302
                  %v304 = vld [vmem:[%s274 + $0x70] sm:%s267]
                  %305 = vst [vmem:[%s275 + $0x38] sm:%s267] %v304
                  %v306 = vld [vmem:[%s274 + $0x78] sm:%s267]
                  %307 = vst [vmem:[%s275 + $0x3c] sm:%s267] %v306
                $region63: #{ngcf_forward.3} parent=50 // loop_footer
                  %s273 = sadd.s32 1, %s269
                $region64: #{ngcf_forward.3} parent=50 // loop_footer_branch
                  %268 = sbr.rel target = $region60
                $region65: #{ngcf_forward.3} parent=50 // loop_exit
                  _
              $region51: #{ngcf_forward.3} parent=35 // pred_fallthru
                _
            $region36: #{ngcf_forward.3} parent=31 // pred_fallthru
              _
            // Predicated region
            $region37: #{ngcf_forward.3} parent=31 // pred_check
              _
            $region38: #{ngcf_forward.3} parent=31 // pred_check_branch
              %213 = sbr.rel (0) target = $region40
            $region39: #{ngcf_forward.3} parent=31 // pred_region
              %s215 = ssub.s32 16, 1
              loop: start=0, step=1, limit=1
              $region41: #{ngcf_forward.3} parent=39 // loop_pre_header
                _
              $region42: #{ngcf_forward.3} parent=39 // loop_header
                %s217 = sphi 0, %s221
                %p218 = scmp.ge.s32.totalorder %s217, 1
                %s222 = sphi %s207, %s207
                %s223 = sphi %s202, %s202
              $region43: #{ngcf_forward.3} parent=39 // loop_header_branch
                %220 = sbr.rel (%p218) target = $region47
              $region44: #{ngcf_forward.3} parent=39 // loop_body
                %v224 = vld [vmem:[%s222] sm:%s215]
                %225 = vst [vmem:[%s223] sm:%s215] %v224
                %v226 = vld [vmem:[%s222 + $0x8] sm:%s215]
                %227 = vst [vmem:[%s223 + $0x4] sm:%s215] %v226
                %v228 = vld [vmem:[%s222 + $0x10] sm:%s215]
                %229 = vst [vmem:[%s223 + $0x8] sm:%s215] %v228
                %v230 = vld [vmem:[%s222 + $0x18] sm:%s215]
                %231 = vst [vmem:[%s223 + $0xc] sm:%s215] %v230
                %v232 = vld [vmem:[%s222 + $0x20] sm:%s215]
                %233 = vst [vmem:[%s223 + $0x10] sm:%s215] %v232
                %v234 = vld [vmem:[%s222 + $0x28] sm:%s215]
                %235 = vst [vmem:[%s223 + $0x14] sm:%s215] %v234
                %v236 = vld [vmem:[%s222 + $0x30] sm:%s215]
                %237 = vst [vmem:[%s223 + $0x18] sm:%s215] %v236
                %v238 = vld [vmem:[%s222 + $0x38] sm:%s215]
                %239 = vst [vmem:[%s223 + $0x1c] sm:%s215] %v238
                %v240 = vld [vmem:[%s222 + $0x40] sm:%s215]
                %241 = vst [vmem:[%s223 + $0x20] sm:%s215] %v240
                %v242 = vld [vmem:[%s222 + $0x48] sm:%s215]
                %243 = vst [vmem:[%s223 + $0x24] sm:%s215] %v242
                %v244 = vld [vmem:[%s222 + $0x50] sm:%s215]
                %245 = vst [vmem:[%s223 + $0x28] sm:%s215] %v244
                %v246 = vld [vmem:[%s222 + $0x58] sm:%s215]
                %247 = vst [vmem:[%s223 + $0x2c] sm:%s215] %v246
                %v248 = vld [vmem:[%s222 + $0x60] sm:%s215]
                %249 = vst [vmem:[%s223 + $0x30] sm:%s215] %v248
                %v250 = vld [vmem:[%s222 + $0x68] sm:%s215]
                %251 = vst [vmem:[%s223 + $0x34] sm:%s215] %v250
                %v252 = vld [vmem:[%s222 + $0x70] sm:%s215]
                %253 = vst [vmem:[%s223 + $0x38] sm:%s215] %v252
                %v254 = vld [vmem:[%s222 + $0x78] sm:%s215]
                %255 = vst [vmem:[%s223 + $0x3c] sm:%s215] %v254
              $region45: #{ngcf_forward.3} parent=39 // loop_footer
                %s221 = sadd.s32 1, %s217
              $region46: #{ngcf_forward.3} parent=39 // loop_footer_branch
                %216 = sbr.rel target = $region42
              $region47: #{ngcf_forward.3} parent=39 // loop_exit
                _
            $region40: #{ngcf_forward.3} parent=31 // pred_fallthru
              _
          $region32: #{ngcf_forward.3} parent=27 // pred_fallthru
            _
          %308 = vnop
        $region28: #{ngcf_forward.3} parent=23 // pred_fallthru
          _
        // Predicated region
        $region66: #{ngcf_forward.3} parent=23 // pred_check
          %p309 = pneg %p71
        $region67: #{ngcf_forward.3} parent=23 // pred_check_branch
          %311 = sbr.rel (%p309) target = $region69
        $region68: #{ngcf_forward.3} parent=23 // pred_region
          %s312 = smul.u32 16, %s19
          %p313 = scmp.lt.s32.totalorder %s312, 31
          %s314 = scalar_select %p313, %s312, 31
          %s315 = smul.addr %s314, 8
          %s316 = scalar_lea.vmem %s1, %s315
          %s317 = smul.u32 16, %s19
        $region69: #{ngcf_forward.3} parent=23 // pred_fallthru
          _
        // Predicated region
        $region70: #{ngcf_forward.3} parent=23 // pred_check
          %p318 = pneg %p97
        $region71: #{ngcf_forward.3} parent=23 // pred_check_branch
          %320 = sbr.rel (%p318) target = $region73
        $region72: #{ngcf_forward.3} parent=23 // pred_region
          %s321 = smul.u32 16, %s18
          %p322 = scmp.lt.s32.totalorder %s321, 31
          %s323 = scalar_select %p322, %s321, 31
          %s324 = smul.addr %s323, 8
          %s325 = scalar_lea.vmem %s2, %s324
          %s326 = smul.u32 16, %s18
        $region73: #{ngcf_forward.3} parent=23 // pred_fallthru
          _
      $region24: #{ngcf_forward.3} parent=5 // pred_fallthru
        _
      %p327 = scmp.le.s32.totalorder 1, %s11
      %p328 = scmp.lt.s32.totalorder %s11, 5
      %p329 = pnand %p327, %p328
      %p330 = pneg %p329
      // Predicated region
      $region74: #{ngcf_forward.3} parent=5 // pred_check
        _
      $region75: #{ngcf_forward.3} parent=5 // pred_check_branch
        %332 = sbr.rel (%p329) target = $region77
      $region76: #{ngcf_forward.3} parent=5 // pred_region
        %s333 = ssub.s32 %s11, 1
        %s334 = sand.u32 %s38, 1
        %s335 = sand.u32 %s38, 1
        %s336 = smul.addr %s335, 64
        %s337 = scalar_lea.vmem [#allocation3], %s336
        // Predicated region
        $region78: #{ngcf_forward.3} parent=76 // pred_check
          %p338 = pneg %p51
        $region79: #{ngcf_forward.3} parent=76 // pred_check_branch
          %340 = sbr.rel (%p338) target = $region81
        $region80: #{ngcf_forward.3} parent=76 // pred_region
          _
        $region81: #{ngcf_forward.3} parent=76 // pred_fallthru
          _
        %s341 = sand.u32 %s38, 1
        %s342 = sand.u32 %s38, 1
        %s343 = smul.addr %s342, 64
        %s344 = scalar_lea.vmem [#allocation3], %s343
        %p345 = pneg %p51
        %p346 = pneg %p48
        %s347 = smul.u32 16, %s21
        %p348 = scmp.lt.s32.totalorder %s347, 31
        %s349 = scalar_select %p348, %s347, 31
        %s350 = smul.addr %s349, 8
        %s351 = scalar_lea.vmem %s1, %s350
        %p352 = pneg %p77
        %p353 = pneg %p74
        %s354 = smul.u32 16, %s20
        %p355 = scmp.lt.s32.totalorder %s354, 31
        %s356 = scalar_select %p355, %s354, 31
        %s357 = smul.addr %s356, 8
        %s358 = scalar_lea.vmem %s2, %s357
        %p359 = pneg %p103
        %p360 = pneg %p100
        %p361 = pneg %p124
        %p362 = pneg %p121
        %p363 = pneg %p145
        %p364 = pneg %p142
        %p365 = pneg %p171
        %p366 = pneg %p168
        %s367 = smul.u32 16, %s20
        %p368 = scmp.lt.s32.totalorder %s367, 31
        %s369 = scalar_select %p368, %s367, 31
        %s370 = smul.addr %s369, 8
        %s371 = scalar_lea.vmem %s5, %s370
        %s372 = smul.u32 16, %s20
        %s373 = smul.u32 16, %s21
        %p374 = scmp.lt.s32.totalorder %s373, 31
        %s375 = scalar_select %p374, %s373, 31
        %s376 = smul.addr %s375, 8
        %s377 = scalar_lea.vmem %s1, %s376
        %s378 = smul.u32 16, %s21
        %s379 = smul.u32 16, %s20
        %p380 = scmp.lt.s32.totalorder %s379, 31
        %s381 = scalar_select %p380, %s379, 31
        %s382 = smul.addr %s381, 8
        %s383 = scalar_lea.vmem %s2, %s382
        %s384 = smul.u32 16, %s20
        %s385 = smul.u32 16, %s20
        %p386 = scmp.lt.s32.totalorder %s385, 31
        %s387 = scalar_select %p386, %s385, 31
        %s388 = smul.addr %s387, 8
        %s389 = scalar_lea.vmem %s5, %s388
        %s390 = smul.u32 16, %s20
        %p392 = scmp.eq.s32.totalorder %s21, 0
        // Predicated region
        $region82: #{ngcf_forward.3} parent=76 // pred_check
          %p393 = pneg %p392
        $region83: #{ngcf_forward.3} parent=76 // pred_check_branch
          %395 = sbr.rel (%p393) target = $region85
        $region84: #{ngcf_forward.3} parent=76 // pred_region
          %vm396 = vcmask 130048
          %397 = vst.msk [vmem:[#allocation2] sm:$0xff] %vm396, 0.0
          %398 = vst.msk [vmem:[#allocation2 + $0x8] sm:$0xff] %vm396, 0.0
          %399 = vst.msk [vmem:[#allocation2 + $0x10] sm:$0xff] %vm396, 0.0
          %400 = vst.msk [vmem:[#allocation2 + $0x18] sm:$0xff] %vm396, 0.0
          %401 = vst.msk [vmem:[#allocation2 + $0x20] sm:$0xff] %vm396, 0.0
          %402 = vst.msk [vmem:[#allocation2 + $0x28] sm:$0xff] %vm396, 0.0
          %403 = vst.msk [vmem:[#allocation2 + $0x30] sm:$0xff] %vm396, 0.0
          %404 = vst.msk [vmem:[#allocation2 + $0x38] sm:$0xff] %vm396, 0.0
          %405 = vst.msk [vmem:[#allocation2 + $0x40] sm:$0xff] %vm396, 0.0
          %406 = vst.msk [vmem:[#allocation2 + $0x48] sm:$0xff] %vm396, 0.0
          %407 = vst.msk [vmem:[#allocation2 + $0x50] sm:$0xff] %vm396, 0.0
          %408 = vst.msk [vmem:[#allocation2 + $0x58] sm:$0xff] %vm396, 0.0
          %409 = vst.msk [vmem:[#allocation2 + $0x60] sm:$0xff] %vm396, 0.0
          %410 = vst.msk [vmem:[#allocation2 + $0x68] sm:$0xff] %vm396, 0.0
          %411 = vst.msk [vmem:[#allocation2 + $0x70] sm:$0xff] %vm396, 0.0
          %412 = vst.msk [vmem:[#allocation2 + $0x78] sm:$0xff] %vm396, 0.0
        $region85: #{ngcf_forward.3} parent=76 // pred_fallthru
          _
        %v413 = vld [vmem:[#allocation2] sm:$0xff]
        %v414 = vld [vmem:[#allocation2 + $0x8] sm:$0xff]
        %v415 = vld [vmem:[#allocation2 + $0x10] sm:$0xff]
        %v416 = vld [vmem:[#allocation2 + $0x18] sm:$0xff]
        %v417 = vld [vmem:[#allocation2 + $0x20] sm:$0xff]
        %v418 = vld [vmem:[#allocation2 + $0x28] sm:$0xff]
        %v419 = vld [vmem:[#allocation2 + $0x30] sm:$0xff]
        %v420 = vld [vmem:[#allocation2 + $0x38] sm:$0xff]
        %v421 = vld [vmem:[#allocation2 + $0x40] sm:$0xff]
        %v422 = vld [vmem:[#allocation2 + $0x48] sm:$0xff]
        %v423 = vld [vmem:[#allocation2 + $0x50] sm:$0xff]
        %v424 = vld [vmem:[#allocation2 + $0x58] sm:$0xff]
        %v425 = vld [vmem:[#allocation2 + $0x60] sm:$0xff]
        %v426 = vld [vmem:[#allocation2 + $0x68] sm:$0xff]
        %v427 = vld [vmem:[#allocation2 + $0x70] sm:$0xff]
        %v428 = vld [vmem:[#allocation2 + $0x78] sm:$0xff]
        %v429 = vld [vmem:[%s337] sm:$0xf]
        %v430 = vld [vmem:[%s337 + $0x4] sm:$0xf]
        %v431 = vld [vmem:[%s337 + $0x8] sm:$0xf]
        %v432 = vld [vmem:[%s337 + $0xc] sm:$0xf]
        %v433 = vld [vmem:[%s337 + $0x10] sm:$0xf]
        %v434 = vld [vmem:[%s337 + $0x14] sm:$0xf]
        %v435 = vld [vmem:[%s337 + $0x18] sm:$0xf]
        %v436 = vld [vmem:[%s337 + $0x1c] sm:$0xf]
        %v437 = vld [vmem:[%s337 + $0x20] sm:$0xf]
        %v438 = vld [vmem:[%s337 + $0x24] sm:$0xf]
        %v439 = vld [vmem:[%s337 + $0x28] sm:$0xf]
        %v440 = vld [vmem:[%s337 + $0x2c] sm:$0xf]
        %v441 = vld [vmem:[%s337 + $0x30] sm:$0xf]
        %v442 = vld [vmem:[%s337 + $0x34] sm:$0xf]
        %v443 = vld [vmem:[%s337 + $0x38] sm:$0xf]
        %v444 = vld [vmem:[%s337 + $0x3c] sm:$0xf]
        %v445 = vld [vmem:[%s377] sm:$0xff]
        %v446 = vld [vmem:[%s377 + $0x8] sm:$0xff]
        %v447 = vld [vmem:[%s377 + $0x10] sm:$0xff]
        %v448 = vld [vmem:[%s377 + $0x18] sm:$0xff]
        %v449 = vld [vmem:[%s377 + $0x20] sm:$0xff]
        %v450 = vld [vmem:[%s377 + $0x28] sm:$0xff]
        %v451 = vld [vmem:[%s377 + $0x30] sm:$0xff]
        %v452 = vld [vmem:[%s377 + $0x38] sm:$0xff]
        %v453 = vld [vmem:[%s377 + $0x40] sm:$0xff]
        %v454 = vld [vmem:[%s377 + $0x48] sm:$0xff]
        %v455 = vld [vmem:[%s377 + $0x50] sm:$0xff]
        %v456 = vld [vmem:[%s377 + $0x58] sm:$0xff]
        %v457 = vld [vmem:[%s377 + $0x60] sm:$0xff]
        %v458 = vld [vmem:[%s377 + $0x68] sm:$0xff]
        %v459 = vld [vmem:[%s377 + $0x70] sm:$0xff]
        %v460 = vld [vmem:[%s377 + $0x78] sm:$0xff]
        %v461 = vpack.c.bf16 %v446, %v445
        %v462 = vpack.c.bf16 %v448, %v447
        %v463 = vpack.c.bf16 %v450, %v449
        %v464 = vpack.c.bf16 %v452, %v451
        %v465 = vpack.c.bf16 %v454, %v453
        %v466 = vpack.c.bf16 %v456, %v455
        %v467 = vpack.c.bf16 %v458, %v457
        %v468 = vpack.c.bf16 %v460, %v459
        %v485 = vunpack.c.l.b16 %v429
        %v486 = vunpack.c.l.b16 %v430
        %v487 = vunpack.c.l.b16 %v431
        %v488 = vunpack.c.l.b16 %v432
        %v489 = vunpack.c.l.b16 %v433
        %v490 = vunpack.c.l.b16 %v434
        %v491 = vunpack.c.l.b16 %v435
        %v492 = vunpack.c.l.b16 %v436
        %v493 = vunpack.c.l.b16 %v437
        %v494 = vunpack.c.l.b16 %v438
        %v495 = vunpack.c.l.b16 %v439
        %v496 = vunpack.c.l.b16 %v440
        %v497 = vunpack.c.l.b16 %v441
        %v498 = vunpack.c.l.b16 %v442
        %v499 = vunpack.c.l.b16 %v443
        %v500 = vunpack.c.l.b16 %v444
        %v501 = vpack.c.b16 %v486, %v485
        %v502 = vpack.c.b16 %v488, %v487
        %v503 = vpack.c.b16 %v490, %v489
        %v504 = vpack.c.b16 %v492, %v491
        %v505 = vpack.c.b16 %v494, %v493
        %v506 = vpack.c.b16 %v496, %v495
        %v507 = vpack.c.b16 %v498, %v497
        %v508 = vpack.c.b16 %v500, %v499
        %517 = vmatprep.subr.bf16.mxu0 0
        %518 = vmatpush1.bf16.msra.mxu0 %v468
        %519 = vmatprep.subr.bf16.mxu0 0
        %520 = vmatpush1.bf16.msra.mxu0 %v467
        %521 = vmatprep.subr.bf16.mxu0 0
        %522 = vmatpush1.bf16.msra.mxu0 %v466
        %523 = vmatprep.subr.bf16.mxu0 0
        %524 = vmatpush1.bf16.msra.mxu0 %v465
        %525 = vmatprep.subr.bf16.mxu0 0
        %526 = vmatpush1.bf16.msra.mxu0 %v464
        %527 = vmatprep.subr.bf16.mxu0 0
        %528 = vmatpush1.bf16.msra.mxu0 %v463
        %529 = vmatprep.subr.bf16.mxu0 0
        %530 = vmatpush1.bf16.msra.mxu0 %v462
        %531 = vmatprep.subr.bf16.mxu0 0
        %532 = vmatpush1.bf16.msra.mxu0 %v461
        %533 = vmatprep.subr.bf16.mxu0 0
        %534 = vmatpush2.bf16.msra.mxu0 0
        %535 = vmatprep.subr.bf16.mxu0 0
        %536 = vmatpush2.bf16.msra.mxu0 0
        %537 = vmatprep.subr.bf16.mxu0 0
        %538 = vmatpush2.bf16.msra.mxu0 0
        %539 = vmatprep.subr.bf16.mxu0 0
        %540 = vmatpush2.bf16.msra.mxu0 0
        %541 = vmatprep.subr.bf16.mxu0 0
        %542 = vmatpush2.bf16.msra.mxu0 0
        %543 = vmatprep.subr.bf16.mxu0 0
        %544 = vmatpush2.bf16.msra.mxu0 0
        %545 = vmatprep.subr.bf16.mxu0 0
        %546 = vmatpush2.bf16.msra.mxu0 0
        %547 = vmatprep.subr.bf16.mxu0 0
        %548 = vmatpush2.bf16.msra.mxu0 0
        %549 = vmatprep.mubr.bf16.mxu0 0
        %550 = vmatmul.mubr.bf16.gmra.mxu0 %v501
        %v551 = vpop.f32.mrf.mxu0
        %v552 = vadd.f32 0.0, %v551
        %v553 = vpop.f32.mrf.mxu0
        %v554 = vpop.f32.mrf.mxu0
        %v555 = vadd.f32 0.0, %v554
        %v556 = vpop.f32.mrf.mxu0
        %557 = vmatprep.mubr.bf16.mxu0 0
        %558 = vmatmul.mubr.bf16.gmra.mxu0 %v502
        %v559 = vpop.f32.mrf.mxu0
        %v560 = vadd.f32 0.0, %v559
        %v561 = vpop.f32.mrf.mxu0
        %v562 = vpop.f32.mrf.mxu0
        %v563 = vadd.f32 0.0, %v562
        %v564 = vpop.f32.mrf.mxu0
        %565 = vmatprep.mubr.bf16.mxu0 0
        %566 = vmatmul.mubr.bf16.gmra.mxu0 %v503
        %v567 = vpop.f32.mrf.mxu0
        %v568 = vadd.f32 0.0, %v567
        %v569 = vpop.f32.mrf.mxu0
        %v570 = vpop.f32.mrf.mxu0
        %v571 = vadd.f32 0.0, %v570
        %v572 = vpop.f32.mrf.mxu0
        %573 = vmatprep.mubr.bf16.mxu0 0
        %574 = vmatmul.mubr.bf16.gmra.mxu0 %v504
        %v575 = vpop.f32.mrf.mxu0
        %v576 = vadd.f32 0.0, %v575
        %v577 = vpop.f32.mrf.mxu0
        %v578 = vpop.f32.mrf.mxu0
        %v579 = vadd.f32 0.0, %v578
        %v580 = vpop.f32.mrf.mxu0
        %581 = vmatprep.mubr.bf16.mxu0 0
        %582 = vmatmul.mubr.bf16.gmra.mxu0 %v505
        %v583 = vpop.f32.mrf.mxu0
        %v584 = vadd.f32 0.0, %v583
        %v585 = vpop.f32.mrf.mxu0
        %v586 = vpop.f32.mrf.mxu0
        %v587 = vadd.f32 0.0, %v586
        %v588 = vpop.f32.mrf.mxu0
        %589 = vmatprep.mubr.bf16.mxu0 0
        %590 = vmatmul.mubr.bf16.gmra.mxu0 %v506
        %v591 = vpop.f32.mrf.mxu0
        %v592 = vadd.f32 0.0, %v591
        %v593 = vpop.f32.mrf.mxu0
        %v594 = vpop.f32.mrf.mxu0
        %v595 = vadd.f32 0.0, %v594
        %v596 = vpop.f32.mrf.mxu0
        %597 = vmatprep.mubr.bf16.mxu0 0
        %598 = vmatmul.mubr.bf16.gmra.mxu0 %v507
        %v599 = vpop.f32.mrf.mxu0
        %v600 = vadd.f32 0.0, %v599
        %v601 = vpop.f32.mrf.mxu0
        %v602 = vpop.f32.mrf.mxu0
        %v603 = vadd.f32 0.0, %v602
        %v604 = vpop.f32.mrf.mxu0
        %605 = vmatprep.mubr.bf16.mxu0 0
        %606 = vmatmul.mubr.bf16.gmra.mxu0 %v508
        %v607 = vpop.f32.mrf.mxu0
        %v608 = vadd.f32 0.0, %v607
        %v609 = vpop.f32.mrf.mxu0
        %v610 = vpop.f32.mrf.mxu0
        %v611 = vadd.f32 0.0, %v610
        %v612 = vpop.f32.mrf.mxu0
        %613 = vdwg.mxu0
        %v614 = vadd.f32 %v413, %v552
        %v615 = vadd.f32 %v414, %v555
        %v616 = vadd.f32 %v415, %v560
        %v617 = vadd.f32 %v416, %v563
        %v618 = vadd.f32 %v417, %v568
        %v619 = vadd.f32 %v418, %v571
        %v620 = vadd.f32 %v419, %v576
        %v621 = vadd.f32 %v420, %v579
        %v622 = vadd.f32 %v421, %v584
        %v623 = vadd.f32 %v422, %v587
        %v624 = vadd.f32 %v423, %v592
        %v625 = vadd.f32 %v424, %v595
        %v626 = vadd.f32 %v425, %v600
        %v627 = vadd.f32 %v426, %v603
        %v628 = vadd.f32 %v427, %v608
        %v629 = vadd.f32 %v428, %v611
        %vm630 = vcmask 130048
        %631 = vst.msk [vmem:[#allocation2] sm:$0xff] %vm630, %v614
        %632 = vst.msk [vmem:[#allocation2 + $0x8] sm:$0xff] %vm630, %v615
        %633 = vst.msk [vmem:[#allocation2 + $0x10] sm:$0xff] %vm630, %v616
        %634 = vst.msk [vmem:[#allocation2 + $0x18] sm:$0xff] %vm630, %v617
        %635 = vst.msk [vmem:[#allocation2 + $0x20] sm:$0xff] %vm630, %v618
        %636 = vst.msk [vmem:[#allocation2 + $0x28] sm:$0xff] %vm630, %v619
        %637 = vst.msk [vmem:[#allocation2 + $0x30] sm:$0xff] %vm630, %v620
        %638 = vst.msk [vmem:[#allocation2 + $0x38] sm:$0xff] %vm630, %v621
        %639 = vst.msk [vmem:[#allocation2 + $0x40] sm:$0xff] %vm630, %v622
        %640 = vst.msk [vmem:[#allocation2 + $0x48] sm:$0xff] %vm630, %v623
        %641 = vst.msk [vmem:[#allocation2 + $0x50] sm:$0xff] %vm630, %v624
        %642 = vst.msk [vmem:[#allocation2 + $0x58] sm:$0xff] %vm630, %v625
        %643 = vst.msk [vmem:[#allocation2 + $0x60] sm:$0xff] %vm630, %v626
        %644 = vst.msk [vmem:[#allocation2 + $0x68] sm:$0xff] %vm630, %v627
        %645 = vst.msk [vmem:[#allocation2 + $0x70] sm:$0xff] %vm630, %v628
        %646 = vst.msk [vmem:[#allocation2 + $0x78] sm:$0xff] %vm630, %v629
        %p647 = scmp.eq.s32.totalorder %s21, 1
        // Predicated region
        $region86: #{ngcf_forward.3} parent=76 // pred_check
          %p648 = pneg %p647
        $region87: #{ngcf_forward.3} parent=76 // pred_check_branch
          %650 = sbr.rel (%p648) target = $region89
        $region88: #{ngcf_forward.3} parent=76 // pred_region
          %v651 = vld [vmem:[#allocation2] sm:$0xff]
          %v652 = vld [vmem:[#allocation2 + $0x8] sm:$0xff]
          %v653 = vld [vmem:[#allocation2 + $0x10] sm:$0xff]
          %v654 = vld [vmem:[#allocation2 + $0x18] sm:$0xff]
          %v655 = vld [vmem:[#allocation2 + $0x20] sm:$0xff]
          %v656 = vld [vmem:[#allocation2 + $0x28] sm:$0xff]
          %v657 = vld [vmem:[#allocation2 + $0x30] sm:$0xff]
          %v658 = vld [vmem:[#allocation2 + $0x38] sm:$0xff]
          %v659 = vld [vmem:[#allocation2 + $0x40] sm:$0xff]
          %v660 = vld [vmem:[#allocation2 + $0x48] sm:$0xff]
          %v661 = vld [vmem:[#allocation2 + $0x50] sm:$0xff]
          %v662 = vld [vmem:[#allocation2 + $0x58] sm:$0xff]
          %v663 = vld [vmem:[#allocation2 + $0x60] sm:$0xff]
          %v664 = vld [vmem:[#allocation2 + $0x68] sm:$0xff]
          %v665 = vld [vmem:[#allocation2 + $0x70] sm:$0xff]
          %v666 = vld [vmem:[#allocation2 + $0x78] sm:$0xff]
          %v667 = vld [vmem:[%s383] sm:$0xff]
          %v668 = vld [vmem:[%s383 + $0x8] sm:$0xff]
          %v669 = vld [vmem:[%s383 + $0x10] sm:$0xff]
          %v670 = vld [vmem:[%s383 + $0x18] sm:$0xff]
          %v671 = vld [vmem:[%s383 + $0x20] sm:$0xff]
          %v672 = vld [vmem:[%s383 + $0x28] sm:$0xff]
          %v673 = vld [vmem:[%s383 + $0x30] sm:$0xff]
          %v674 = vld [vmem:[%s383 + $0x38] sm:$0xff]
          %v675 = vld [vmem:[%s383 + $0x40] sm:$0xff]
          %v676 = vld [vmem:[%s383 + $0x48] sm:$0xff]
          %v677 = vld [vmem:[%s383 + $0x50] sm:$0xff]
          %v678 = vld [vmem:[%s383 + $0x58] sm:$0xff]
          %v679 = vld [vmem:[%s383 + $0x60] sm:$0xff]
          %v680 = vld [vmem:[%s383 + $0x68] sm:$0xff]
          %v681 = vld [vmem:[%s383 + $0x70] sm:$0xff]
          %v682 = vld [vmem:[%s383 + $0x78] sm:$0xff]
          %v683 = vmul.f32 %v667, %v651
          %v684 = vmul.f32 %v668, %v652
          %v685 = vmul.f32 %v669, %v653
          %v686 = vmul.f32 %v670, %v654
          %v687 = vmul.f32 %v671, %v655
          %v688 = vmul.f32 %v672, %v656
          %v689 = vmul.f32 %v673, %v657
          %v690 = vmul.f32 %v674, %v658
          %v691 = vmul.f32 %v675, %v659
          %v692 = vmul.f32 %v676, %v660
          %v693 = vmul.f32 %v677, %v661
          %v694 = vmul.f32 %v678, %v662
          %v695 = vmul.f32 %v679, %v663
          %v696 = vmul.f32 %v680, %v664
          %v697 = vmul.f32 %v681, %v665
          %v698 = vmul.f32 %v682, %v666
          %715 = vrot.lane.b32.xlu0 %v683, 16
          %v716 = vpop.permute.xlu0 %715
          %717 = vrot.lane.b32.xlu0 %v684, 16
          %v718 = vpop.permute.xlu0 %717
          %719 = vrot.lane.b32.xlu0 %v685, 16
          %v720 = vpop.permute.xlu0 %719
          %721 = vrot.lane.b32.xlu0 %v686, 16
          %v722 = vpop.permute.xlu0 %721
          %723 = vrot.lane.b32.xlu0 %v687, 16
          %v724 = vpop.permute.xlu0 %723
          %725 = vrot.lane.b32.xlu0 %v688, 16
          %v726 = vpop.permute.xlu0 %725
          %727 = vrot.lane.b32.xlu0 %v689, 16
          %v728 = vpop.permute.xlu0 %727
          %729 = vrot.lane.b32.xlu0 %v690, 16
          %v730 = vpop.permute.xlu0 %729
          %731 = vrot.lane.b32.xlu0 %v691, 16
          %v732 = vpop.permute.xlu0 %731
          %733 = vrot.lane.b32.xlu0 %v692, 16
          %v734 = vpop.permute.xlu0 %733
          %735 = vrot.lane.b32.xlu0 %v693, 16
          %v736 = vpop.permute.xlu0 %735
          %737 = vrot.lane.b32.xlu0 %v694, 16
          %v738 = vpop.permute.xlu0 %737
          %739 = vrot.lane.b32.xlu0 %v695, 16
          %v740 = vpop.permute.xlu0 %739
          %741 = vrot.lane.b32.xlu0 %v696, 16
          %v742 = vpop.permute.xlu0 %741
          %743 = vrot.lane.b32.xlu0 %v697, 16
          %v744 = vpop.permute.xlu0 %743
          %745 = vrot.lane.b32.xlu0 %v698, 16
          %v746 = vpop.permute.xlu0 %745
          %v763 = vsel %vm630, %v651, %v716
          %v764 = vsel %vm630, %v652, %v718
          %v765 = vsel %vm630, %v653, %v720
          %v766 = vsel %vm630, %v654, %v722
          %v767 = vsel %vm630, %v655, %v724
          %v768 = vsel %vm630, %v656, %v726
          %v769 = vsel %vm630, %v657, %v728
          %v770 = vsel %vm630, %v658, %v730
          %v771 = vsel %vm630, %v659, %v732
          %v772 = vsel %vm630, %v660, %v734
          %v773 = vsel %vm630, %v661, %v736
          %v774 = vsel %vm630, %v662, %v738
          %v775 = vsel %vm630, %v663, %v740
          %v776 = vsel %vm630, %v664, %v742
          %v777 = vsel %vm630, %v665, %v744
          %v778 = vsel %vm630, %v666, %v746
          %v779 = vld [vmem:[%s3] sm:$0xff]
          %v780 = vld [vmem:[%s3 + $0x8] sm:$0xff]
          %v781 = vld [vmem:[%s3 + $0x10] sm:$0xff]
          %v782 = vld [vmem:[%s3 + $0x18] sm:$0xff]
          %v783 = vld [vmem:[%s4] sm:$0x1]
          %v785 = vlaneseq
          %v786 = vshrl.u32 %v785, 7
          %v787 = vsub.s32 0, %v786
          %v788 = vrot.slane %v783, %v787
          %vm790 = vcmask 261120
          %v792 = vsel %vm790, %v763, 0
          %v795 = vsel %vm790, %v764, 0
          %v798 = vsel %vm790, %v765, 0
          %v801 = vsel %vm790, %v766, 0
          %v804 = vsel %vm790, %v767, 0
          %v807 = vsel %vm790, %v768, 0
          %v810 = vsel %vm790, %v769, 0
          %v813 = vsel %vm790, %v770, 0
          %v816 = vsel %vm790, %v771, 0
          %v819 = vsel %vm790, %v772, 0
          %v822 = vsel %vm790, %v773, 0
          %v825 = vsel %vm790, %v774, 0
          %v828 = vsel %vm790, %v775, 0
          %v831 = vsel %vm790, %v776, 0
          %v834 = vsel %vm790, %v777, 0
          %v837 = vsel %vm790, %v778, 0
          %839 = vmatprep.subr.mxu0 0.0
          %840 = vmatpush1.msra.mxu0 0.0
          %841 = vmatprep.subr.mxu0 0.0
          %842 = vmatpush1.msra.mxu0 0.0
          %843 = vmatprep.subr.mxu0 0.0
          %844 = vmatpush1.msra.mxu0 0.0
          %845 = vmatprep.subr.mxu0 0.0
          %846 = vmatpush1.msra.mxu0 0.0
          %847 = vmatprep.subr.mxu0 0.0
          %848 = vmatpush1.msra.mxu0 0.0
          %849 = vmatprep.subr.mxu0 0.0
          %850 = vmatpush1.msra.mxu0 0.0
          %851 = vmatprep.subr.mxu0 0.0
          %852 = vmatpush1.msra.mxu0 0.0
          %853 = vmatprep.subr.mxu0 0.0
          %854 = vmatpush1.msra.mxu0 0.0
          %855 = vmatprep.subr.mxu0 0.0
          %856 = vmatpush1.msra.mxu0 0.0
          %857 = vmatprep.subr.mxu0 0.0
          %858 = vmatpush1.msra.mxu0 0.0
          %859 = vmatprep.subr.mxu0 0.0
          %860 = vmatpush1.msra.mxu0 0.0
          %861 = vmatprep.subr.mxu0 0.0
          %862 = vmatpush1.msra.mxu0 0.0
          %863 = vmatprep.subr.mxu0 0.0
          %864 = vmatpush1.msra.mxu0 %v782
          %865 = vmatprep.subr.mxu0 0.0
          %866 = vmatpush1.msra.mxu0 %v781
          %867 = vmatprep.subr.mxu0 0.0
          %868 = vmatpush1.msra.mxu0 %v780
          %869 = vmatprep.subr.mxu0 0.0
          %870 = vmatpush1.msra.mxu0 %v779
          %871 = vmatprep.subr.mxu0 0.0
          %872 = vmatpush2.msra.mxu0 0.0
          %873 = vmatprep.subr.mxu0 0.0
          %874 = vmatpush2.msra.mxu0 0.0
          %875 = vmatprep.subr.mxu0 0.0
          %876 = vmatpush2.msra.mxu0 0.0
          %877 = vmatprep.subr.mxu0 0.0
          %878 = vmatpush2.msra.mxu0 0.0
          %879 = vmatprep.subr.mxu0 0.0
          %880 = vmatpush2.msra.mxu0 0.0
          %881 = vmatprep.subr.mxu0 0.0
          %882 = vmatpush2.msra.mxu0 0.0
          %883 = vmatprep.subr.mxu0 0.0
          %884 = vmatpush2.msra.mxu0 0.0
          %885 = vmatprep.subr.mxu0 0.0
          %886 = vmatpush2.msra.mxu0 0.0
          %887 = vmatprep.subr.mxu0 0.0
          %888 = vmatpush2.msra.mxu0 0.0
          %889 = vmatprep.subr.mxu0 0.0
          %890 = vmatpush2.msra.mxu0 0.0
          %891 = vmatprep.subr.mxu0 0.0
          %892 = vmatpush2.msra.mxu0 0.0
          %893 = vmatprep.subr.mxu0 0.0
          %894 = vmatpush2.msra.mxu0 0.0
          %895 = vmatprep.subr.mxu0 0.0
          %896 = vmatpush2.msra.mxu0 0.0
          %897 = vmatprep.subr.mxu0 0.0
          %898 = vmatpush2.msra.mxu0 0.0
          %899 = vmatprep.subr.mxu0 0.0
          %900 = vmatpush2.msra.mxu0 0.0
          %901 = vmatprep.subr.mxu0 0.0
          %902 = vmatpush2.msra.mxu0 0.0
          %903 = vmatprep.mubr.f32.mxu0 0.0
          %904 = vmatmul.mubr.f32.gmra.mxu0 %v792
          %v905 = vpop.f32.mrf.mxu0
          %v906 = vadd.f32 %v788, %v905
          %v907 = vpop.f32.mrf.mxu0
          %908 = vmatprep.mubr.f32.mxu0 0.0
          %909 = vmatmul.mubr.f32.gmra.mxu0 %v795
          %v910 = vpop.f32.mrf.mxu0
          %v911 = vadd.f32 %v788, %v910
          %v912 = vpop.f32.mrf.mxu0
          %913 = vmatprep.mubr.f32.mxu0 0.0
          %914 = vmatmul.mubr.f32.gmra.mxu0 %v798
          %v915 = vpop.f32.mrf.mxu0
          %v916 = vadd.f32 %v788, %v915
          %v917 = vpop.f32.mrf.mxu0
          %918 = vmatprep.mubr.f32.mxu0 0.0
          %919 = vmatmul.mubr.f32.gmra.mxu0 %v801
          %v920 = vpop.f32.mrf.mxu0
          %v921 = vadd.f32 %v788, %v920
          %v922 = vpop.f32.mrf.mxu0
          %923 = vmatprep.mubr.f32.mxu0 0.0
          %924 = vmatmul.mubr.f32.gmra.mxu0 %v804
          %v925 = vpop.f32.mrf.mxu0
          %v926 = vadd.f32 %v788, %v925
          %v927 = vpop.f32.mrf.mxu0
          %928 = vmatprep.mubr.f32.mxu0 0.0
          %929 = vmatmul.mubr.f32.gmra.mxu0 %v807
          %v930 = vpop.f32.mrf.mxu0
          %v931 = vadd.f32 %v788, %v930
          %v932 = vpop.f32.mrf.mxu0
          %933 = vmatprep.mubr.f32.mxu0 0.0
          %934 = vmatmul.mubr.f32.gmra.mxu0 %v810
          %v935 = vpop.f32.mrf.mxu0
          %v936 = vadd.f32 %v788, %v935
          %v937 = vpop.f32.mrf.mxu0
          %938 = vmatprep.mubr.f32.mxu0 0.0
          %939 = vmatmul.mubr.f32.gmra.mxu0 %v813
          %v940 = vpop.f32.mrf.mxu0
          %v941 = vadd.f32 %v788, %v940
          %v942 = vpop.f32.mrf.mxu0
          %943 = vmatprep.mubr.f32.mxu0 0.0
          %944 = vmatmul.mubr.f32.gmra.mxu0 %v816
          %v945 = vpop.f32.mrf.mxu0
          %v946 = vadd.f32 %v788, %v945
          %v947 = vpop.f32.mrf.mxu0
          %948 = vmatprep.mubr.f32.mxu0 0.0
          %949 = vmatmul.mubr.f32.gmra.mxu0 %v819
          %v950 = vpop.f32.mrf.mxu0
          %v951 = vadd.f32 %v788, %v950
          %v952 = vpop.f32.mrf.mxu0
          %953 = vmatprep.mubr.f32.mxu0 0.0
          %954 = vmatmul.mubr.f32.gmra.mxu0 %v822
          %v955 = vpop.f32.mrf.mxu0
          %v956 = vadd.f32 %v788, %v955
          %v957 = vpop.f32.mrf.mxu0
          %958 = vmatprep.mubr.f32.mxu0 0.0
          %959 = vmatmul.mubr.f32.gmra.mxu0 %v825
          %v960 = vpop.f32.mrf.mxu0
          %v961 = vadd.f32 %v788, %v960
          %v962 = vpop.f32.mrf.mxu0
          %963 = vmatprep.mubr.f32.mxu0 0.0
          %964 = vmatmul.mubr.f32.gmra.mxu0 %v828
          %v965 = vpop.f32.mrf.mxu0
          %v966 = vadd.f32 %v788, %v965
          %v967 = vpop.f32.mrf.mxu0
          %968 = vmatprep.mubr.f32.mxu0 0.0
          %969 = vmatmul.mubr.f32.gmra.mxu0 %v831
          %v970 = vpop.f32.mrf.mxu0
          %v971 = vadd.f32 %v788, %v970
          %v972 = vpop.f32.mrf.mxu0
          %973 = vmatprep.mubr.f32.mxu0 0.0
          %974 = vmatmul.mubr.f32.gmra.mxu0 %v834
          %v975 = vpop.f32.mrf.mxu0
          %v976 = vadd.f32 %v788, %v975
          %v977 = vpop.f32.mrf.mxu0
          %978 = vmatprep.mubr.f32.mxu0 0.0
          %979 = vmatmul.mubr.f32.gmra.mxu0 %v837
          %v980 = vpop.f32.mrf.mxu0
          %v981 = vadd.f32 %v788, %v980
          %v982 = vpop.f32.mrf.mxu0
          %983 = vdwg.mxu0
          %vm984 = vcmp.ge.f32.partialorder %v906, 0.0
          %vm985 = vcmp.ge.f32.partialorder %v911, 0.0
          %vm986 = vcmp.ge.f32.partialorder %v916, 0.0
          %vm987 = vcmp.ge.f32.partialorder %v921, 0.0
          %vm988 = vcmp.ge.f32.partialorder %v926, 0.0
          %vm989 = vcmp.ge.f32.partialorder %v931, 0.0
          %vm990 = vcmp.ge.f32.partialorder %v936, 0.0
          %vm991 = vcmp.ge.f32.partialorder %v941, 0.0
          %vm992 = vcmp.ge.f32.partialorder %v946, 0.0
          %vm993 = vcmp.ge.f32.partialorder %v951, 0.0
          %vm994 = vcmp.ge.f32.partialorder %v956, 0.0
          %vm995 = vcmp.ge.f32.partialorder %v961, 0.0
          %vm996 = vcmp.ge.f32.partialorder %v966, 0.0
          %vm997 = vcmp.ge.f32.partialorder %v971, 0.0
          %vm998 = vcmp.ge.f32.partialorder %v976, 0.0
          %vm999 = vcmp.ge.f32.partialorder %v981, 0.0
          %v1000 = vmul.f32 %v906, 0.2
          %v1001 = vmul.f32 %v911, 0.2
          %v1002 = vmul.f32 %v916, 0.2
          %v1003 = vmul.f32 %v921, 0.2
          %v1004 = vmul.f32 %v926, 0.2
          %v1005 = vmul.f32 %v931, 0.2
          %v1006 = vmul.f32 %v936, 0.2
          %v1007 = vmul.f32 %v941, 0.2
          %v1008 = vmul.f32 %v946, 0.2
          %v1009 = vmul.f32 %v951, 0.2
          %v1010 = vmul.f32 %v956, 0.2
          %v1011 = vmul.f32 %v961, 0.2
          %v1012 = vmul.f32 %v966, 0.2
          %v1013 = vmul.f32 %v971, 0.2
          %v1014 = vmul.f32 %v976, 0.2
          %v1015 = vmul.f32 %v981, 0.2
          %v1016 = vsel %vm984, %v906, %v1000
          %v1017 = vsel %vm985, %v911, %v1001
          %v1018 = vsel %vm986, %v916, %v1002
          %v1019 = vsel %vm987, %v921, %v1003
          %v1020 = vsel %vm988, %v926, %v1004
          %v1021 = vsel %vm989, %v931, %v1005
          %v1022 = vsel %vm990, %v936, %v1006
          %v1023 = vsel %vm991, %v941, %v1007
          %v1024 = vsel %vm992, %v946, %v1008
          %v1025 = vsel %vm993, %v951, %v1009
          %v1026 = vsel %vm994, %v956, %v1010
          %v1027 = vsel %vm995, %v961, %v1011
          %v1028 = vsel %vm996, %v966, %v1012
          %v1029 = vsel %vm997, %v971, %v1013
          %v1030 = vsel %vm998, %v976, %v1014
          %v1031 = vsel %vm999, %v981, %v1015
          %v1032 = vmul.f32 %v1016, %v1016
          %v1033 = vmul.f32 %v1017, %v1017
          %v1034 = vmul.f32 %v1018, %v1018
          %v1035 = vmul.f32 %v1019, %v1019
          %v1036 = vmul.f32 %v1020, %v1020
          %v1037 = vmul.f32 %v1021, %v1021
          %v1038 = vmul.f32 %v1022, %v1022
          %v1039 = vmul.f32 %v1023, %v1023
          %v1040 = vmul.f32 %v1024, %v1024
          %v1041 = vmul.f32 %v1025, %v1025
          %v1042 = vmul.f32 %v1026, %v1026
          %v1043 = vmul.f32 %v1027, %v1027
          %v1044 = vmul.f32 %v1028, %v1028
          %v1045 = vmul.f32 %v1029, %v1029
          %v1046 = vmul.f32 %v1030, %v1030
          %v1047 = vmul.f32 %v1031, %v1031
          %v1048 = vsel %vm630, %v1032, 0.0
          %1049 = vadd.xlane.f32.xlu0 %v1048
          %v1050 = vpop.xlane.xlu0 %1049
          %v1051 = vsel %vm630, %v1033, 0.0
          %1052 = vadd.xlane.f32.xlu0 %v1051
          %v1053 = vpop.xlane.xlu0 %1052
          %v1054 = vsel %vm630, %v1034, 0.0
          %1055 = vadd.xlane.f32.xlu0 %v1054
          %v1056 = vpop.xlane.xlu0 %1055
          %v1057 = vsel %vm630, %v1035, 0.0
          %1058 = vadd.xlane.f32.xlu0 %v1057
          %v1059 = vpop.xlane.xlu0 %1058
          %v1060 = vsel %vm630, %v1036, 0.0
          %1061 = vadd.xlane.f32.xlu0 %v1060
          %v1062 = vpop.xlane.xlu0 %1061
          %v1063 = vsel %vm630, %v1037, 0.0
          %1064 = vadd.xlane.f32.xlu0 %v1063
          %v1065 = vpop.xlane.xlu0 %1064
          %v1066 = vsel %vm630, %v1038, 0.0
          %1067 = vadd.xlane.f32.xlu0 %v1066
          %v1068 = vpop.xlane.xlu0 %1067
          %v1069 = vsel %vm630, %v1039, 0.0
          %1070 = vadd.xlane.f32.xlu0 %v1069
          %v1071 = vpop.xlane.xlu0 %1070
          %v1072 = vsel %vm630, %v1040, 0.0
          %1073 = vadd.xlane.f32.xlu0 %v1072
          %v1074 = vpop.xlane.xlu0 %1073
          %v1075 = vsel %vm630, %v1041, 0.0
          %1076 = vadd.xlane.f32.xlu0 %v1075
          %v1077 = vpop.xlane.xlu0 %1076
          %v1078 = vsel %vm630, %v1042, 0.0
          %1079 = vadd.xlane.f32.xlu0 %v1078
          %v1080 = vpop.xlane.xlu0 %1079
          %v1081 = vsel %vm630, %v1043, 0.0
          %1082 = vadd.xlane.f32.xlu0 %v1081
          %v1083 = vpop.xlane.xlu0 %1082
          %v1084 = vsel %vm630, %v1044, 0.0
          %1085 = vadd.xlane.f32.xlu0 %v1084
          %v1086 = vpop.xlane.xlu0 %1085
          %v1087 = vsel %vm630, %v1045, 0.0
          %1088 = vadd.xlane.f32.xlu0 %v1087
          %v1089 = vpop.xlane.xlu0 %1088
          %v1090 = vsel %vm630, %v1046, 0.0
          %1091 = vadd.xlane.f32.xlu0 %v1090
          %v1092 = vpop.xlane.xlu0 %1091
          %v1093 = vsel %vm630, %v1047, 0.0
          %1094 = vadd.xlane.f32.xlu0 %v1093
          %v1095 = vpop.xlane.xlu0 %1094
          %v1096 = vmax.f32 %v1050, 1e-24
          %v1097 = vmax.f32 %v1053, 1e-24
          %v1098 = vmax.f32 %v1056, 1e-24
          %v1099 = vmax.f32 %v1059, 1e-24
          %v1100 = vmax.f32 %v1062, 1e-24
          %v1101 = vmax.f32 %v1065, 1e-24
          %v1102 = vmax.f32 %v1068, 1e-24
          %v1103 = vmax.f32 %v1071, 1e-24
          %v1104 = vmax.f32 %v1074, 1e-24
          %v1105 = vmax.f32 %v1077, 1e-24
          %v1106 = vmax.f32 %v1080, 1e-24
          %v1107 = vmax.f32 %v1083, 1e-24
          %v1108 = vmax.f32 %v1086, 1e-24
          %v1109 = vmax.f32 %v1089, 1e-24
          %v1110 = vmax.f32 %v1092, 1e-24
          %v1111 = vmax.f32 %v1095, 1e-24
          %v1112 = vrsqrt.pop %v1096
          %v1113 = vrsqrt.pop %v1097
          %v1114 = vrsqrt.pop %v1098
          %v1115 = vrsqrt.pop %v1099
          %v1116 = vrsqrt.pop %v1100
          %v1117 = vrsqrt.pop %v1101
          %v1118 = vrsqrt.pop %v1102
          %v1119 = vrsqrt.pop %v1103
          %v1120 = vrsqrt.pop %v1104
          %v1121 = vrsqrt.pop %v1105
          %v1122 = vrsqrt.pop %v1106
          %v1123 = vrsqrt.pop %v1107
          %v1124 = vrsqrt.pop %v1108
          %v1125 = vrsqrt.pop %v1109
          %v1126 = vrsqrt.pop %v1110
          %v1127 = vrsqrt.pop %v1111
          %v1128 = vmul.f32 %v1016, %v1112
          %v1129 = vmul.f32 %v1017, %v1113
          %v1130 = vmul.f32 %v1018, %v1114
          %v1131 = vmul.f32 %v1019, %v1115
          %v1132 = vmul.f32 %v1020, %v1116
          %v1133 = vmul.f32 %v1021, %v1117
          %v1134 = vmul.f32 %v1022, %v1118
          %v1135 = vmul.f32 %v1023, %v1119
          %v1136 = vmul.f32 %v1024, %v1120
          %v1137 = vmul.f32 %v1025, %v1121
          %v1138 = vmul.f32 %v1026, %v1122
          %v1139 = vmul.f32 %v1027, %v1123
          %v1140 = vmul.f32 %v1028, %v1124
          %v1141 = vmul.f32 %v1029, %v1125
          %v1142 = vmul.f32 %v1030, %v1126
          %v1143 = vmul.f32 %v1031, %v1127
          %1160 = vrot.lane.b32.xlu0 %v1128, 16
          %v1161 = vpop.permute.xlu0 %1160
          %1162 = vrot.lane.b32.xlu0 %v1129, 16
          %v1163 = vpop.permute.xlu0 %1162
          %1164 = vrot.lane.b32.xlu0 %v1130, 16
          %v1165 = vpop.permute.xlu0 %1164
          %1166 = vrot.lane.b32.xlu0 %v1131, 16
          %v1167 = vpop.permute.xlu0 %1166
          %1168 = vrot.lane.b32.xlu0 %v1132, 16
          %v1169 = vpop.permute.xlu0 %1168
          %1170 = vrot.lane.b32.xlu0 %v1133, 16
          %v1171 = vpop.permute.xlu0 %1170
          %1172 = vrot.lane.b32.xlu0 %v1134, 16
          %v1173 = vpop.permute.xlu0 %1172
          %1174 = vrot.lane.b32.xlu0 %v1135, 16
          %v1175 = vpop.permute.xlu0 %1174
          %1176 = vrot.lane.b32.xlu0 %v1136, 16
          %v1177 = vpop.permute.xlu0 %1176
          %1178 = vrot.lane.b32.xlu0 %v1137, 16
          %v1179 = vpop.permute.xlu0 %1178
          %1180 = vrot.lane.b32.xlu0 %v1138, 16
          %v1181 = vpop.permute.xlu0 %1180
          %1182 = vrot.lane.b32.xlu0 %v1139, 16
          %v1183 = vpop.permute.xlu0 %1182
          %1184 = vrot.lane.b32.xlu0 %v1140, 16
          %v1185 = vpop.permute.xlu0 %1184
          %1186 = vrot.lane.b32.xlu0 %v1141, 16
          %v1187 = vpop.permute.xlu0 %1186
          %1188 = vrot.lane.b32.xlu0 %v1142, 16
          %v1189 = vpop.permute.xlu0 %1188
          %1190 = vrot.lane.b32.xlu0 %v1143, 16
          %v1191 = vpop.permute.xlu0 %1190
          %v1208 = vsel %vm630, %v1016, %v1161
          %v1209 = vsel %vm630, %v1017, %v1163
          %v1210 = vsel %vm630, %v1018, %v1165
          %v1211 = vsel %vm630, %v1019, %v1167
          %v1212 = vsel %vm630, %v1020, %v1169
          %v1213 = vsel %vm630, %v1021, %v1171
          %v1214 = vsel %vm630, %v1022, %v1173
          %v1215 = vsel %vm630, %v1023, %v1175
          %v1216 = vsel %vm630, %v1024, %v1177
          %v1217 = vsel %vm630, %v1025, %v1179
          %v1218 = vsel %vm630, %v1026, %v1181
          %v1219 = vsel %vm630, %v1027, %v1183
          %v1220 = vsel %vm630, %v1028, %v1185
          %v1221 = vsel %vm630, %v1029, %v1187
          %v1222 = vsel %vm630, %v1030, %v1189
          %v1223 = vsel %vm630, %v1031, %v1191
          %1224 = vst.msk [vmem:[%s389] sm:$0xff] %vm790, %v1208
          %1225 = vst.msk [vmem:[%s389 + $0x8] sm:$0xff] %vm790, %v1209
          %1226 = vst.msk [vmem:[%s389 + $0x10] sm:$0xff] %vm790, %v1210
          %1227 = vst.msk [vmem:[%s389 + $0x18] sm:$0xff] %vm790, %v1211
          %1228 = vst.msk [vmem:[%s389 + $0x20] sm:$0xff] %vm790, %v1212
          %1229 = vst.msk [vmem:[%s389 + $0x28] sm:$0xff] %vm790, %v1213
          %1230 = vst.msk [vmem:[%s389 + $0x30] sm:$0xff] %vm790, %v1214
          %1231 = vst.msk [vmem:[%s389 + $0x38] sm:$0xff] %vm790, %v1215
          %1232 = vst.msk [vmem:[%s389 + $0x40] sm:$0xff] %vm790, %v1216
          %1233 = vst.msk [vmem:[%s389 + $0x48] sm:$0xff] %vm790, %v1217
          %1234 = vst.msk [vmem:[%s389 + $0x50] sm:$0xff] %vm790, %v1218
          %1235 = vst.msk [vmem:[%s389 + $0x58] sm:$0xff] %vm790, %v1219
          %1236 = vst.msk [vmem:[%s389 + $0x60] sm:$0xff] %vm790, %v1220
          %1237 = vst.msk [vmem:[%s389 + $0x68] sm:$0xff] %vm790, %v1221
          %1238 = vst.msk [vmem:[%s389 + $0x70] sm:$0xff] %vm790, %v1222
          %1239 = vst.msk [vmem:[%s389 + $0x78] sm:$0xff] %vm790, %v1223
        $region89: #{ngcf_forward.3} parent=76 // pred_fallthru
          _
        %s1240 = smul.u32 16, %s20
        %p1241 = scmp.lt.s32.totalorder %s1240, 31
        %s1242 = scalar_select %p1241, %s1240, 31
        %s1243 = smul.addr %s1242, 8
        %s1244 = scalar_lea.vmem %s5, %s1243
        // Predicated region
        $region90: #{ngcf_forward.3} parent=76 // pred_check
          %p1245 = pneg %p168
        $region91: #{ngcf_forward.3} parent=76 // pred_check_branch
          %1247 = sbr.rel (%p1245) target = $region93
        $region92: #{ngcf_forward.3} parent=76 // pred_region
          %s1248 = smul.u32 16, %s20
        $region93: #{ngcf_forward.3} parent=76 // pred_fallthru
          _
      $region77: #{ngcf_forward.3} parent=5 // pred_fallthru
        _
      %p1249 = scmp.le.s32.totalorder 2, %s11
      // Predicated region
      $region94: #{ngcf_forward.3} parent=5 // pred_check
        %p1250 = pneg %p1249
      $region95: #{ngcf_forward.3} parent=5 // pred_check_branch
        %1252 = sbr.rel (%p1250) target = $region97
      $region96: #{ngcf_forward.3} parent=5 // pred_region
        %s1253 = ssub.s32 %s11, 2
        // Predicated region
        $region98: #{ngcf_forward.3} parent=96 // pred_check
          %p1254 = pneg %p174
        $region99: #{ngcf_forward.3} parent=96 // pred_check_branch
          %1256 = sbr.rel (%p1254) target = $region101
        $region100: #{ngcf_forward.3} parent=96 // pred_region
          %s1257 = smul.u32 16, %s22
          %p1258 = scmp.lt.s32.totalorder %s1257, 31
          %s1259 = scalar_select %p1258, %s1257, 31
          %s1260 = smul.addr %s1259, 8
          %s1261 = scalar_lea.vmem %s5, %s1260
        $region101: #{ngcf_forward.3} parent=96 // pred_fallthru
          _
      $region97: #{ngcf_forward.3} parent=5 // pred_fallthru
        _
    $region6: #{ngcf_forward.3} parent=1 // loop_footer
      %s15 = sadd.s32 1, %s11
    $region7: #{ngcf_forward.3} parent=1 // loop_footer_branch
      %10 = sbr.rel target = $region3
    $region8: #{ngcf_forward.3} parent=1 // loop_exit
      _

</llo_original>
